<compile_context>
chip_gen: v7x
topology: tpu7x:2x2x1
jax: 0.10.0
libtpu: 0.0.40
codegen_flags: <defaults>
</compile_context>

<pallas_src>
import jax
import jax.numpy as jnp
from jax.experimental import pallas as pl
from jax.experimental.pallas import tpu as pltpu

IN_FEATURES = 2
HIDDEN = 128
OUT_FEATURES = 4
OUT_PAD = 128          # lane-dense minimum for the output slab
MAX_TB = 1024          # max batch rows per grid step


# -----------------------------------------------------------------------------
# Pallas kernel: out = relu(x @ W1 + b1) @ W2 + b2   (layer 1 on the VPU)
# -----------------------------------------------------------------------------
def dqn_kernel(x_ref, w1_ref, b1_ref, w2_ref, b2_ref, o_ref):
    # x_ref : (TB, 2)        f32
    # w1_ref: (2, HIDDEN)    f32
    # b1_ref: (1, HIDDEN)    f32
    # w2_ref: (HIDDEN, 128)  f32  (cols >= 4 are zero)
    # b2_ref: (1, 128)       f32  (cols >= 4 are zero)
    # o_ref : (TB, 128)      f32
    x = x_ref[...]
    w1 = w1_ref[...]
    # Layer 1: K=2 contraction as two broadcast FMAs on the VPU.
    h = x[:, 0:1] * w1[0:1, :] + x[:, 1:2] * w1[1:2, :] + b1_ref[...]
    h = jnp.maximum(h, 0.0)                                   # ReLU on VPU
    # Layer 2: K=128 contraction on the MXU, f32 accumulate.
    o = jnp.dot(h, w2_ref[...], preferred_element_type=jnp.float32)
    o_ref[...] = o + b2_ref[...]
    # TODO(synk): if the downstream consumer (argmax / max over the 4 actions)
    # is known, fuse it here to avoid the 32x-overweight (B,128) writeback.


# -----------------------------------------------------------------------------
# Host-side helpers
# -----------------------------------------------------------------------------
def _round_up(n, m):
    return -(-n // m) * m


def _tile_bytes(rows, cols, itemsize=4):
    # VMEM footprint of one pipeline buffer, with (8,128) layout padding.
    return _round_up(rows, 8) * _round_up(cols, 128) * itemsize


def _vmem_limit_bytes(tb):
    dbl = 2  # double-buffered pipeline buffers
    total = (
        _tile_bytes(tb, IN_FEATURES)          # x tile
        + _tile_bytes(tb, OUT_PAD)            # out tile
        + _tile_bytes(IN_FEATURES, HIDDEN)    # w1
        + _tile_bytes(1, HIDDEN)              # b1
        + _tile_bytes(HIDDEN, OUT_PAD)        # w2
        + _tile_bytes(1, OUT_PAD)             # b2
    ) * dbl
    return total + (4 << 20)                  # headroom for compiler scratch


def _choose_batch_tiling(B):
    """Pick (tile_rows, padded_batch) with tile_rows % 8 == 0, <= MAX_TB,
    balancing rows across grid steps so padding waste stays <= 7 rows/tile."""
    n_tiles = max(1, -(-B // MAX_TB))            # cdiv
    tb = _round_up(-(-B // n_tiles), 8)          # rows per tile, multiple of 8
    return tb, n_tiles * tb


def init_params(key):
    """Deterministic init mimicking torch.nn.Linear (uniform +-1/sqrt(fan_in)).

    Weights stored as (in_features, out_features) so the kernel does x @ W.
    """
    k1, k2, k3, k4 = jax.random.split(key, 4)
    bound1 = 1.0 / jnp.sqrt(jnp.float32(IN_FEATURES))
    bound2 = 1.0 / jnp.sqrt(jnp.float32(HIDDEN))
    w1 = jax.random.uniform(k1, (IN_FEATURES, HIDDEN), jnp.float32, -bound1, bound1)
    b1 = jax.random.uniform(k2, (HIDDEN,), jnp.float32, -bound1, bound1)
    w2 = jax.random.uniform(k3, (HIDDEN, OUT_FEATURES), jnp.float32, -bound2, bound2)
    b2 = jax.random.uniform(k4, (OUT_FEATURES,), jnp.float32, -bound2, bound2)
    return w1, b1, w2, b2


def prepare_params(w1, b1, w2, b2):
    """One-time padding of weights/biases to TPU-friendly shapes (hoisted out
    of the per-call forward path)."""
    w1_p = w1.astype(jnp.float32)                                  # (2, 128)
    b1_p = b1.reshape(1, HIDDEN).astype(jnp.float32)               # (1, 128)
    w2_p = jnp.pad(w2.astype(jnp.float32),
                   ((0, 0), (0, OUT_PAD - OUT_FEATURES)))          # (128, 128)
    b2_p = jnp.pad(b2.reshape(1, OUT_FEATURES).astype(jnp.float32),
                   ((0, 0), (0, OUT_PAD - OUT_FEATURES)))          # (1, 128)
    return w1_p, b1_p, w2_p, b2_p


def dqn_forward(x, w1_p, b1_p, w2_p, b2_p):
    """x: (B, 2) f32; padded params from prepare_params(). Returns (B, 4)."""
    B = x.shape[0]
    tb, b_pad = _choose_batch_tiling(B)
    grid = (b_pad // tb,)

    x_p = jnp.pad(x.astype(jnp.float32), ((0, b_pad - B), (0, 0)))

    out_p = pl.pallas_call(
        dqn_kernel,
        out_shape=jax.ShapeDtypeStruct((b_pad, OUT_PAD), jnp.float32),
        grid=grid,
        in_specs=[
            pl.BlockSpec((tb, IN_FEATURES), lambda i: (i, 0)),      # x: per-tile
            pl.BlockSpec((IN_FEATURES, HIDDEN), lambda i: (0, 0)),  # w1: resident
            pl.BlockSpec((1, HIDDEN), lambda i: (0, 0)),            # b1: resident
            pl.BlockSpec((HIDDEN, OUT_PAD), lambda i: (0, 0)),      # w2: resident
            pl.BlockSpec((1, OUT_PAD), lambda i: (0, 0)),           # b2: resident
        ],
        out_specs=pl.BlockSpec((tb, OUT_PAD), lambda i: (i, 0)),
        compiler_params=pltpu.CompilerParams(
            dimension_semantics=("parallel",),
            vmem_limit_bytes=_vmem_limit_bytes(tb),
        ),
    )(x_p, w1_p, b1_p, w2_p, b2_p)

    return out_p[:B, :OUT_FEATURES]


dqn_forward_jit = jax.jit(dqn_forward)


if __name__ == "__main__":
    key = jax.random.PRNGKey(0)
    kx, kx2, kp = jax.random.split(key, 3)

    w1, b1, w2, b2 = init_params(kp)
    padded = prepare_params(w1, b1, w2, b2)

    def ref_fwd(x):
        return jnp.maximum(x @ w1 + b1, 0.0) @ w2 + b2

    # Case 1: small batch, multiple of 8.
    B1 = 8
    x1 = jax.random.normal(kx, (B1, IN_FEATURES), jnp.float32)
    out1 = jax.block_until_ready(dqn_forward_jit(x1, *padded))
    assert out1.shape == (B1, OUT_FEATURES)
    assert jnp.allclose(out1, ref_fwd(x1), atol=1e-5, rtol=1e-5)

    # Case 2: batch not a multiple of 8 (exercises the padding / slicing path).
    B2 = 5
    x2 = jax.random.normal(kx2, (B2, IN_FEATURES), jnp.float32)
    out2 = jax.block_until_ready(dqn_forward_jit(x2, *padded))
    assert out2.shape == (B2, OUT_FEATURES)
    assert jnp.allclose(out2, ref_fwd(x2), atol=1e-5, rtol=1e-5)

    print("KERNEL_OK")
</pallas_src>

<mosaic_0001>
module attributes {stable_mosaic.version = 11 : i64} {
  func.func @dqn_kernel(%arg0: i32, %arg1: memref<8x2xf32, #tpu.memory_space<vmem>>, %arg2: memref<2x128xf32, #tpu.memory_space<vmem>>, %arg3: memref<1x128xf32, #tpu.memory_space<vmem>>, %arg4: memref<128x128xf32, #tpu.memory_space<vmem>>, %arg5: memref<1x128xf32, #tpu.memory_space<vmem>>, %arg6: memref<8x128xf32, #tpu.memory_space<vmem>>) attributes {dimension_semantics = [#tpu.dimension_semantics<parallel>], iteration_bounds = array<i64: 1>, scalar_prefetch = 0 : i64, scratch_operands = 0 : i64, tpu.core_type = #tpu.core_type<tc>, window_params = [{transform_indices = @transform_0, window_bounds = array<i64: 8, 2>}, {pipeline_mode = #tpu.pipeline_mode<synchronous>, transform_indices = @transform_1, window_bounds = array<i64: 2, 128>}, {pipeline_mode = #tpu.pipeline_mode<synchronous>, transform_indices = @transform_2, window_bounds = array<i64: 1, 128>}, {pipeline_mode = #tpu.pipeline_mode<synchronous>, transform_indices = @transform_3, window_bounds = array<i64: 128, 128>}, {pipeline_mode = #tpu.pipeline_mode<synchronous>, transform_indices = @transform_4, window_bounds = array<i64: 1, 128>}, {transform_indices = @transform_5, window_bounds = array<i64: 8, 128>}]} {
    %c0 = arith.constant 0 : index
    %c0_0 = arith.constant 0 : index
    %0 = vector.load %arg1[%c0, %c0_0] : memref<8x2xf32, #tpu.memory_space<vmem>>, vector<8x2xf32>
    %c0_1 = arith.constant 0 : index
    %c0_2 = arith.constant 0 : index
    %1 = vector.load %arg2[%c0_1, %c0_2] : memref<2x128xf32, #tpu.memory_space<vmem>>, vector<2x128xf32>
    %2 = vector.extract_strided_slice %0 {offsets = [0, 0], sizes = [8, 1], strides = [1, 1]} : vector<8x2xf32> to vector<8x1xf32>
    %3 = vector.extract_strided_slice %1 {offsets = [0, 0], sizes = [1, 128], strides = [1, 1]} : vector<2x128xf32> to vector<1x128xf32>
    %4 = vector.broadcast %2 : vector<8x1xf32> to vector<8x128xf32>
    %5 = vector.broadcast %3 : vector<1x128xf32> to vector<8x128xf32>
    %6 = arith.mulf %4, %5 : vector<8x128xf32>
    %7 = vector.extract_strided_slice %0 {offsets = [0, 1], sizes = [8, 1], strides = [1, 1]} : vector<8x2xf32> to vector<8x1xf32>
    %8 = vector.extract_strided_slice %1 {offsets = [1, 0], sizes = [1, 128], strides = [1, 1]} : vector<2x128xf32> to vector<1x128xf32>
    %9 = vector.broadcast %7 : vector<8x1xf32> to vector<8x128xf32>
    %10 = vector.broadcast %8 : vector<1x128xf32> to vector<8x128xf32>
    %11 = arith.mulf %9, %10 : vector<8x128xf32>
    %12 = arith.addf %6, %11 : vector<8x128xf32>
    %c0_3 = arith.constant 0 : index
    %c0_4 = arith.constant 0 : index
    %13 = vector.load %arg3[%c0_3, %c0_4] : memref<1x128xf32, #tpu.memory_space<vmem>>, vector<1x128xf32>
    %14 = vector.broadcast %13 : vector<1x128xf32> to vector<8x128xf32>
    %15 = arith.addf %12, %14 : vector<8x128xf32>
    %cst = arith.constant 0.000000e+00 : f32
    %16 = vector.broadcast %cst : f32 to vector<8x128xf32>
    %17 = arith.maximumf %15, %16 : vector<8x128xf32>
    %c0_5 = arith.constant 0 : index
    %c0_6 = arith.constant 0 : index
    %18 = vector.load %arg4[%c0_5, %c0_6] : memref<128x128xf32, #tpu.memory_space<vmem>>, vector<128x128xf32>
    %cst_7 = arith.constant dense<0.000000e+00> : vector<8x128xf32>
    %19 = tpu.matmul %17, %18, %cst_7 {dimension_numbers = #tpu.dot_dimension_numbers<[1], [0], [0], [1], [0, 0, 1, 1], [], []>} : vector<8x128xf32>, vector<128x128xf32>, vector<8x128xf32> -> vector<8x128xf32>
    %c0_8 = arith.constant 0 : index
    %c0_9 = arith.constant 0 : index
    %20 = vector.load %arg5[%c0_8, %c0_9] : memref<1x128xf32, #tpu.memory_space<vmem>>, vector<1x128xf32>
    %21 = vector.broadcast %20 : vector<1x128xf32> to vector<8x128xf32>
    %22 = arith.addf %19, %21 : vector<8x128xf32>
    %c0_10 = arith.constant 0 : index
    %c0_11 = arith.constant 0 : index
    %23 = vector.load %arg6[%c0_10, %c0_11] : memref<8x128xf32, #tpu.memory_space<vmem>>, vector<8x128xf32>
    tpu.vector_store %arg6[%c0_10, %c0_11], %22 {strides = array<i32>} : memref<8x128xf32, #tpu.memory_space<vmem>>, vector<8x128xf32>,
    return
  }
  func.func @transform_0(%arg0: i32) -> (i32, i32) {
    %c0_i32 = arith.constant 0 : i32
    %c0_i32_0 = arith.constant 0 : i32
    return %arg0, %c0_i32 : i32, i32
  }
  func.func @transform_1(%arg0: i32) -> (i32, i32) {
    %c0_i32 = arith.constant 0 : i32
    %c0_i32_0 = arith.constant 0 : i32
    %c0_i32_1 = arith.constant 0 : i32
    return %c0_i32, %c0_i32_0 : i32, i32
  }
  func.func @transform_2(%arg0: i32) -> (i32, i32) {
    %c0_i32 = arith.constant 0 : i32
    %c0_i32_0 = arith.constant 0 : i32
    %c0_i32_1 = arith.constant 0 : i32
    return %c0_i32, %c0_i32_0 : i32, i32
  }
  func.func @transform_3(%arg0: i32) -> (i32, i32) {
    %c0_i32 = arith.constant 0 : i32
    %c0_i32_0 = arith.constant 0 : i32
    %c0_i32_1 = arith.constant 0 : i32
    return %c0_i32, %c0_i32_0 : i32, i32
  }
  func.func @transform_4(%arg0: i32) -> (i32, i32) {
    %c0_i32 = arith.constant 0 : i32
    %c0_i32_0 = arith.constant 0 : i32
    %c0_i32_1 = arith.constant 0 : i32
    return %c0_i32, %c0_i32_0 : i32, i32
  }
  func.func @transform_5(%arg0: i32) -> (i32, i32) {
    %c0_i32 = arith.constant 0 : i32
    %c0_i32_0 = arith.constant 0 : i32
    return %arg0, %c0_i32 : i32, i32
  }
}

</mosaic_0001>

<llo_original>
// kernel: dqn_forward.1
$region0: #{dqn_forward.1}
  #allocation0 [shape = 'u32[]', space=smem, size = 0x4, offset = 0x4, fixed_abs, tag = 'smem constant byte address 0x4 - core index']
  #allocation1 [shape = 'u32[144,128]{1,0:T(1,128)}', space=vmem, size = 0x12000, scoped, tag = 'internal scratch']
  %s0 = inlined_call_operand.vmem [shape: f32[8,2], index: 0, kind: input, shape index: {}]
  %s1 = inlined_call_operand.vmem [shape: f32[2,128], index: 1, kind: input, shape index: {}]
  %s2 = inlined_call_operand.vmem [shape: f32[1,128], index: 2, kind: input, shape index: {}]
  %s3 = inlined_call_operand.hbm [shape: f32[128,128], index: 3, kind: input, shape index: {}]
  %s4 = inlined_call_operand.vmem [shape: f32[1,128], index: 4, kind: input, shape index: {}]
  %s5 = inlined_call_operand.vmem [shape: f32[8,128], index: 5, kind: output, shape index: {}]
  %s6 = sld [smem:[#allocation0]]
  $region34: #{dqn_forward.1} parent=0
    _
  %s8 = ssub.s32 1, %s6
  %s9 = scalar_select 0, %s8, %s6
  $region1: #{dqn_forward.1} parent=0
    #allocation2 [shape = 'u8[65536]{0}', space=vmem, size = 0x10000, scoped, tag = 'input window, operand 3, single buffered']
    #allocation3 [shape = 's32[1]{0}', space=sflag, size = 0x4, scoped, tag = 'scoped memory for dqn_forward.1']
    %10 = vsyncpa [#allocation3], 0
    // Predicated region
    $region2: #{dqn_forward.1} parent=1 // pred_check
      _
    $region3: #{dqn_forward.1} parent=1 // pred_check_branch
      %12 = sbr.rel (0) target = $region5
    $region4: #{dqn_forward.1} parent=1 // pred_region
      _
    $region5: #{dqn_forward.1} parent=1 // pred_fallthru
      _
    // Predicated region
    $region6: #{dqn_forward.1} parent=1 // pred_check
      _
    $region7: #{dqn_forward.1} parent=1 // pred_check_branch
      %14 = sbr.rel (0) target = $region9
    $region8: #{dqn_forward.1} parent=1 // pred_region
      _
    $region9: #{dqn_forward.1} parent=1 // pred_fallthru
      _
    // Predicated region
    $region10: #{dqn_forward.1} parent=1 // pred_check
      _
    $region11: #{dqn_forward.1} parent=1 // pred_check_branch
      %16 = sbr.rel (0) target = $region13
    $region12: #{dqn_forward.1} parent=1 // pred_region
      _
    $region13: #{dqn_forward.1} parent=1 // pred_fallthru
      _
    // Predicated region
    $region14: #{dqn_forward.1} parent=1 // pred_check
      _
    $region15: #{dqn_forward.1} parent=1 // pred_check_branch
      %18 = sbr.rel (0) target = $region17
    $region16: #{dqn_forward.1} parent=1 // pred_region
      %s20 = ssub.s32 2048, 2048
      %21 = vsyncadd [#allocation3], %s20
      %s22 = sshll.u32 [#allocation2], 4
      %s23 = int_to_ptr.vmem [resolvable:$true] %s22
      %28 = dma.hbm_to_vmem [thread:$0]  %s3, 2048, %s23, [#allocation3], 128, 128, 8
    $region17: #{dqn_forward.1} parent=1 // pred_fallthru
      _
    // Predicated region
    $region18: #{dqn_forward.1} parent=1 // pred_check
      _
    $region19: #{dqn_forward.1} parent=1 // pred_check_branch
      %30 = sbr.rel (0) target = $region21
    $region20: #{dqn_forward.1} parent=1 // pred_region
      _
    $region21: #{dqn_forward.1} parent=1 // pred_fallthru
      _
    // Predicated region
    $region22: #{dqn_forward.1} parent=1 // pred_check
      _
    $region23: #{dqn_forward.1} parent=1 // pred_check_branch
      %32 = sbr.rel (0) target = $region25
    $region24: #{dqn_forward.1} parent=1 // pred_region
      %33 = dma.done [#allocation3], 2048
    $region25: #{dqn_forward.1} parent=1 // pred_fallthru
      _
    %v34 = vld [vmem:[%s0] sm:$0xff]
    %v35 = vld [vmem:[%s1] sm:$0x3]
    %37 = vset.pattern.permute.xlu0 0
    %38 = vperm.xlu0 %37, %v34
    %v39 = vpop.permute.xlu0 %38
    %v41 = vlaneseq
    %v42 = vshrl.u32 %v41, 7
    %v43 = vsub.s32 0, %v42
    %v44 = vrot.slane %v35, %v43
    %v45 = vmul.f32 %v39, %v44
    %46 = vset.pattern.permute.xlu0 1
    %47 = vperm.xlu0 %46, %v34
    %v48 = vpop.permute.xlu0 %47
    %v50 = vlaneseq
    %v51 = vshrl.u32 %v50, 7
    %v52 = vsub.s32 1, %v51
    %v53 = vrot.slane %v35, %v52
    %v54 = vmul.f32 %v48, %v53
    %v55 = vadd.f32 %v45, %v54
    %v56 = vld [vmem:[%s2] sm:$0x1]
    %v58 = vlaneseq
    %v59 = vshrl.u32 %v58, 7
    %v60 = vsub.s32 0, %v59
    %v61 = vrot.slane %v56, %v60
    %v63 = vadd.f32 %v55, %v61
    %v64 = vmax.f32 %v63, 0.0
    %v65 = vld [vmem:[#allocation2] sm:$0xff]
    %v66 = vld [vmem:[#allocation2 + $0x8] sm:$0xff]
    %v67 = vld [vmem:[#allocation2 + $0x10] sm:$0xff]
    %v68 = vld [vmem:[#allocation2 + $0x18] sm:$0xff]
    %v69 = vld [vmem:[#allocation2 + $0x20] sm:$0xff]
    %v70 = vld [vmem:[#allocation2 + $0x28] sm:$0xff]
    %v71 = vld [vmem:[#allocation2 + $0x30] sm:$0xff]
    %v72 = vld [vmem:[#allocation2 + $0x38] sm:$0xff]
    %v73 = vld [vmem:[#allocation2 + $0x40] sm:$0xff]
    %v74 = vld [vmem:[#allocation2 + $0x48] sm:$0xff]
    %v75 = vld [vmem:[#allocation2 + $0x50] sm:$0xff]
    %v76 = vld [vmem:[#allocation2 + $0x58] sm:$0xff]
    %v77 = vld [vmem:[#allocation2 + $0x60] sm:$0xff]
    %v78 = vld [vmem:[#allocation2 + $0x68] sm:$0xff]
    %v79 = vld [vmem:[#allocation2 + $0x70] sm:$0xff]
    %v80 = vld [vmem:[#allocation2 + $0x78] sm:$0xff]
    %v81 = vld [vmem:[%s4] sm:$0x1]
    %v83 = vlaneseq
    %v84 = vshrl.u32 %v83, 7
    %v85 = vsub.s32 0, %v84
    %v86 = vrot.slane %v81, %v85
    %88 = vmatprep.subr.mxu0 0.0
    %89 = vmatpush1.msra.mxu0 %v65
    %90 = vmatprep.subr.mxu0 0.0
    %91 = vmatpush1.msra.mxu0 %v66
    %92 = vmatprep.subr.mxu0 0.0
    %93 = vmatpush1.msra.mxu0 %v67
    %94 = vmatprep.subr.mxu0 0.0
    %95 = vmatpush1.msra.mxu0 %v68
    %96 = vmatprep.subr.mxu0 0.0
    %97 = vmatpush1.msra.mxu0 %v69
    %98 = vmatprep.subr.mxu0 0.0
    %99 = vmatpush1.msra.mxu0 %v70
    %100 = vmatprep.subr.mxu0 0.0
    %101 = vmatpush1.msra.mxu0 %v71
    %102 = vmatprep.subr.mxu0 0.0
    %103 = vmatpush1.msra.mxu0 %v72
    %104 = vmatprep.subr.mxu0 0.0
    %105 = vmatpush1.msra.mxu0 %v73
    %106 = vmatprep.subr.mxu0 0.0
    %107 = vmatpush1.msra.mxu0 %v74
    %108 = vmatprep.subr.mxu0 0.0
    %109 = vmatpush1.msra.mxu0 %v75
    %110 = vmatprep.subr.mxu0 0.0
    %111 = vmatpush1.msra.mxu0 %v76
    %112 = vmatprep.subr.mxu0 0.0
    %113 = vmatpush1.msra.mxu0 %v77
    %114 = vmatprep.subr.mxu0 0.0
    %115 = vmatpush1.msra.mxu0 %v78
    %116 = vmatprep.subr.mxu0 0.0
    %117 = vmatpush1.msra.mxu0 %v79
    %118 = vmatprep.subr.mxu0 0.0
    %119 = vmatpush1.msra.mxu0 %v80
    %120 = vmatprep.subr.mxu0 0.0
    %121 = vmatpush1.msra.mxu0 0.0
    %122 = vmatprep.subr.mxu0 0.0
    %123 = vmatpush1.msra.mxu0 0.0
    %124 = vmatprep.subr.mxu0 0.0
    %125 = vmatpush1.msra.mxu0 0.0
    %126 = vmatprep.subr.mxu0 0.0
    %127 = vmatpush1.msra.mxu0 0.0
    %128 = vmatprep.subr.mxu0 0.0
    %129 = vmatpush1.msra.mxu0 0.0
    %130 = vmatprep.subr.mxu0 0.0
    %131 = vmatpush1.msra.mxu0 0.0
    %132 = vmatprep.subr.mxu0 0.0
    %133 = vmatpush1.msra.mxu0 0.0
    %134 = vmatprep.subr.mxu0 0.0
    %135 = vmatpush1.msra.mxu0 0.0
    %136 = vmatprep.subr.mxu0 0.0
    %137 = vmatpush1.msra.mxu0 0.0
    %138 = vmatprep.subr.mxu0 0.0
    %139 = vmatpush1.msra.mxu0 0.0
    %140 = vmatprep.subr.mxu0 0.0
    %141 = vmatpush1.msra.mxu0 0.0
    %142 = vmatprep.subr.mxu0 0.0
    %143 = vmatpush1.msra.mxu0 0.0
    %144 = vmatprep.subr.mxu0 0.0
    %145 = vmatpush1.msra.mxu0 0.0
    %146 = vmatprep.subr.mxu0 0.0
    %147 = vmatpush1.msra.mxu0 0.0
    %148 = vmatprep.subr.mxu0 0.0
    %149 = vmatpush1.msra.mxu0 0.0
    %150 = vmatprep.subr.mxu0 0.0
    %151 = vmatpush1.msra.mxu0 0.0
    %152 = vmatprep.mubr.f32.mxu0 0.0
    %153 = vmatmul.mubr.f32.gmra.mrb[0].mxu0 %v64
    %v154 = vpop.f32.mrb[0].mxu0
    %v155 = vadd.f32 %v86, %v154
    %v156 = vpop.f32.mrb[0].mxu0
    %157 = vdwg.mxu0
    %158 = vst [vmem:[%s5] sm:$0xff] %v155
    // Predicated region
    $region26: #{dqn_forward.1} parent=1 // pred_check
      _
    $region27: #{dqn_forward.1} parent=1 // pred_check_branch
      %160 = sbr.rel (0) target = $region29
    $region28: #{dqn_forward.1} parent=1 // pred_region
      _
    $region29: #{dqn_forward.1} parent=1 // pred_fallthru
      _
    // Predicated region
    $region30: #{dqn_forward.1} parent=1 // pred_check
      _
    $region31: #{dqn_forward.1} parent=1 // pred_check_branch
      %162 = sbr.rel (0) target = $region33
    $region32: #{dqn_forward.1} parent=1 // pred_region
      _
    $region33: #{dqn_forward.1} parent=1 // pred_fallthru
      _
    %163 = vsyncpa [#allocation3], 1

</llo_original>
